<compile_context>
chip_gen: v6e
topology: v6e:2x2x1
jax: 0.10.0
libtpu: 0.0.40
codegen_flags: <defaults>
</compile_context>

<pallas_src>
import jax
import jax.numpy as jnp
import numpy as np
from jax.experimental import pallas as pl
from jax.experimental.pallas import tpu as pltpu


_VMEM_LIMIT = 48 * 1024 * 1024
_ROLL_NUMPY_CONVENTION = None


def _ceil8(n):
    return -(-n // 8) * 8


def _roll_is_numpy_convention():
    """Probe pltpu.roll's shift direction once with a tiny kernel.

    Returns True if pltpu.roll(x, s)[i] == x[(i - s) % n] (jnp.roll convention).
    The conv kernels pick the tap-shift sign from this, so they are correct
    regardless of the lowering's rotate convention."""
    global _ROLL_NUMPY_CONVENTION
    if _ROLL_NUMPY_CONVENTION is None:
        def k(x_ref, o_ref):
            o_ref[...] = pltpu.roll(x_ref[...], 1, axis=1)

        x = jnp.tile(jnp.arange(128, dtype=jnp.float32)[None, :], (8, 1))
        r = pl.pallas_call(
            k, out_shape=jax.ShapeDtypeStruct((8, 128), jnp.float32))(x)
        _ROLL_NUMPY_CONVENTION = bool(float(jax.device_get(r)[0, 0]) == 127.0)
    return _ROLL_NUMPY_CONVENTION


def make_tap_masks(H, W):
    """(9, H*W) f32 0/1 masks: mask[t, q] == 1 iff, for output pixel q, the
    source pixel of tap t (3x3 kernel, row-major taps) lies inside the image."""
    hh, ww = np.meshgrid(np.arange(H), np.arange(W), indexing="ij")
    rows = []
    for oy in (-1, 0, 1):
        for ox in (-1, 0, 1):
            ok = (hh + oy >= 0) & (hh + oy < H) & (ww + ox >= 0) & (ww + ox < W)
            rows.append(ok.reshape(-1).astype(np.float32))
    return jnp.asarray(np.stack(rows, axis=0))


# --------------------------- in-kernel helpers -------------------------------
def _im2col_3x3(cur, mask_ref, W, roll_numpy):
    """Build the (9*Cin, HW) operand of a 3x3 'same' conv entirely in VMEM.

    cur: (Cin, HW) f32 activation (flattened spatial, HW on lanes).
    Tap (oy, ox) is a lane rotation of the flat array by s = oy*W + ox; taps
    whose source would wrap across image rows / edges are zeroed with the
    precomputed masks.  Cin is padded to a multiple of 8, so the sublane
    concatenation is tile-aligned.  Result is cast once to bf16 for the MXU."""
    hw = cur.shape[1]
    views = []
    t = 0
    for oy in (-1, 0, 1):
        for ox in (-1, 0, 1):
            s = oy * W + ox
            if s == 0:
                v = cur
            else:
                shift = (-s) % hw if roll_numpy else s % hw
                v = pltpu.roll(cur, shift, axis=1)
            if t != 4:  # center tap never reads outside the image
                v = v * mask_ref[pl.ds(t, 1), :]
            views.append(v)
            t += 1
    return jnp.concatenate(views, axis=0).astype(jnp.bfloat16)


# ------------------------------ conv kernel ----------------------------------
def _make_conv_kernel(ksize, W, relu, has_res, roll_numpy):
    def kernel(*refs):
        if ksize == 3:
            mask_ref, x_ref, w_ref, b_ref = refs[:4]
            rest = refs[4:]
        else:
            x_ref, w_ref, b_ref = refs[:3]
            rest = refs[3:]
        if has_res:
            res_ref, o_ref = rest
        else:
            (o_ref,) = rest

        x = x_ref[0]  # (Cin_pad, HW) f32
        if ksize == 3:
            xm = _im2col_3x3(x, mask_ref, W, roll_numpy)       # (9*Cin, HW) bf16
        else:
            xm = x.astype(jnp.bfloat16)                        # (Cin, HW) bf16
        acc = jnp.dot(w_ref[...], xm, preferred_element_type=jnp.float32)
        acc = acc + b_ref[...]
        if has_res:
            acc = acc + res_ref[0]
        if relu:
            acc = jnp.maximum(acc, 0.0)
        o_ref[0] = acc.astype(o_ref.dtype)

    return kernel


def conv_flat(x, wb, mask3, H, W, *, ksize, relu=False, residual=None):
    """2-D 'same' conv (stride 1) on flattened activations.

    x:        (N, Cin, H*W) f32
    wb:       (w2, b2) with w2 (Cout, taps*Cin_pad) bf16, b2 (Cout, 1) f32
    residual: optional (N, Cout, H*W) f32 added after bias (fused)
    returns:  (N, Cout, H*W) f32
    """
    w2, b2 = wb
    N, Cin, HW = x.shape
    taps = ksize * ksize
    Cout, K = w2.shape
    Cin_pad = K // taps
    if Cin_pad != Cin:  # align channels to a sublane multiple (zeros)
        x = jnp.pad(x, ((0, 0), (0, Cin_pad - Cin), (0, 0)))

    roll_numpy = _roll_is_numpy_convention()
    kernel = _make_conv_kernel(ksize, W, relu, residual is not None, roll_numpy)

    in_specs = []
    args = []
    if ksize == 3:
        in_specs.append(pl.BlockSpec((9, HW), lambda n: (0, 0)))
        args.append(mask3)
    in_specs += [
        pl.BlockSpec((1, Cin_pad, HW), lambda n: (n, 0, 0)),
        pl.BlockSpec((Cout, K), lambda n: (0, 0)),
        pl.BlockSpec((Cout, 1), lambda n: (0, 0)),
    ]
    args += [x, w2, b2]
    if residual is not None:
        in_specs.append(pl.BlockSpec((1, Cout, HW), lambda n: (n, 0, 0)))
        args.append(residual)

    return pl.pallas_call(
        kernel,
        out_shape=jax.ShapeDtypeStruct((N, Cout, HW), jnp.float32),
        grid=(N,),
        in_specs=in_specs,
        out_specs=pl.BlockSpec((1, Cout, HW), lambda n: (n, 0, 0)),
        compiler_params=pltpu.CompilerParams(
            dimension_semantics=("parallel",),
            vmem_limit_bytes=_VMEM_LIMIT),
    )(*args)


# --------------------------- fused RDB kernel --------------------------------
def _make_rdb_kernel(W, Cin0, G, C, roll_numpy):
    def kernel(*refs):
        mask_ref, x_ref = refs[0], refs[1]
        layer_refs = refs[2:2 + 2 * C]
        wlff_ref, blff_ref = refs[2 + 2 * C], refs[3 + 2 * C]
        o_ref = refs[4 + 2 * C]
        cat_ref = refs[5 + 2 * C]            # VMEM scratch (Ctot, HW) f32

        x0 = x_ref[0]                         # (Cin0, HW) f32
        cat_ref[pl.ds(0, Cin0), :] = x0
        for l in range(C):                    # dense layers, concat kept in VMEM
            cin_l = Cin0 + l * G
            w_ref = layer_refs[2 * l]
            b_ref = layer_refs[2 * l + 1]
            cur = cat_ref[pl.ds(0, cin_l), :]
            xm = _im2col_3x3(cur, mask_ref, W, roll_numpy)
            y = jnp.dot(w_ref[...], xm, preferred_element_type=jnp.float32)
            y = jnp.maximum(y + b_ref[...], 0.0)
            cat_ref[pl.ds(cin_l, G), :] = y
        dense = cat_ref[...].astype(jnp.bfloat16)
        y = jnp.dot(wlff_ref[...], dense, preferred_element_type=jnp.float32)
        o_ref[0] = (y + blff_ref[...] + x0).astype(o_ref.dtype)   # LFF + residual

    return kernel


def rdb_block(x, layers, lff, mask3, H, W):
    """One Residual Dense Block, fused into a single pallas_call."""
    N, Cin0, HW = x.shape
    C = len(layers)
    G = layers[0][0].shape[0]
    wlff, blff = lff

    if Cin0 % 8 != 0 or G % 8 != 0:
        # Unfused fallback keeps sublane offsets inside the fused kernel aligned.
        cur = x
        for wb in layers:
            cur = jnp.concatenate(
                [cur, conv_flat(cur, wb, mask3, H, W, ksize=3, relu=True)], axis=1)
        return conv_flat(cur, lff, mask3, H, W, ksize=1, residual=x)

    Ctot = Cin0 + C * G
    roll_numpy = _roll_is_numpy_convention()
    kernel = _make_rdb_kernel(W, Cin0, G, C, roll_numpy)

    in_specs = [pl.BlockSpec((9, HW), lambda n: (0, 0)),
                pl.BlockSpec((1, Cin0, HW), lambda n: (n, 0, 0))]
    args = [mask3, x]
    for (wl, bl) in layers:
        in_specs.append(pl.BlockSpec(wl.shape, lambda n: (0, 0)))
        in_specs.append(pl.BlockSpec(bl.shape, lambda n: (0, 0)))
        args += [wl, bl]
    in_specs += [pl.BlockSpec(wlff.shape, lambda n: (0, 0)),
                 pl.BlockSpec(blff.shape, lambda n: (0, 0))]
    args += [wlff, blff]

    return pl.pallas_call(
        kernel,
        out_shape=jax.ShapeDtypeStruct((N, Cin0, HW), jnp.float32),
        grid=(N,),
        in_specs=in_specs,
        out_specs=pl.BlockSpec((1, Cin0, HW), lambda n: (n, 0, 0)),
        scratch_shapes=[pltpu.VMEM((Ctot, HW), jnp.float32)],
        compiler_params=pltpu.CompilerParams(
            dimension_semantics=("parallel",),
            vmem_limit_bytes=_VMEM_LIMIT),
    )(*args)


# --------------------------- parameters (PyTorch layout) ---------------------
def _conv_init(key, cout, cin, k):
    wkey, bkey = jax.random.split(key)
    bound = 1.0 / np.sqrt(cin * k * k)       # PyTorch Conv2d default range
    w = jax.random.uniform(wkey, (cout, cin, k, k), jnp.float32, -bound, bound)
    b = jax.random.uniform(bkey, (cout,), jnp.float32, -bound, bound)
    return w, b


def init_rdn_params(key, num_channels, G0, G, D, C):
    ks = iter(jax.random.split(key, 2 + D * (C + 1) + 3))
    p = {"sfe1": _conv_init(next(ks), G0, num_channels, 3),
         "sfe2": _conv_init(next(ks), G0, G0, 3),
         "rdbs": []}
    for i in range(D):
        cin = G0 if i == 0 else G
        layers = [_conv_init(next(ks), G, cin + G * j, 3) for j in range(C)]
        lff = _conv_init(next(ks), cin, cin + G * C, 1)
        p["rdbs"].append({"layers": layers, "lff": lff})
    p["gff1"] = _conv_init(next(ks), G0, G * D, 1)
    p["gff2"] = _conv_init(next(ks), G0, G0, 3)
    p["out"] = _conv_init(next(ks), G0, G0, 3)
    return p


def _prep_conv(w, b):
    """(Cout, Cin, K, K) f32 -> kernel layout (Cout, K*K*Cin_pad) bf16, (Cout,1) f32.
    Row ordering of the contraction is (tap, channel), matching _im2col_3x3."""
    Cout, Cin, KH, KW = w.shape
    Cin_pad = _ceil8(Cin)
    if Cin_pad != Cin:
        w = jnp.pad(w, ((0, 0), (0, Cin_pad - Cin), (0, 0), (0, 0)))
    w2 = jnp.transpose(w, (0, 2, 3, 1)).reshape(Cout, KH * KW * Cin_pad)
    return w2.astype(jnp.bfloat16), b.reshape(Cout, 1).astype(jnp.float32)


def prep_params(p):
    return {
        "sfe1": _prep_conv(*p["sfe1"]),
        "sfe2": _prep_conv(*p["sfe2"]),
        "rdbs": [{"layers": [_prep_conv(w, b) for (w, b) in blk["layers"]],
                  "lff": _prep_conv(*blk["lff"])} for blk in p["rdbs"]],
        "gff1": _prep_conv(*p["gff1"]),
        "gff2": _prep_conv(*p["gff2"]),
        "out": _prep_conv(*p["out"]),
    }


# ------------------------------- forward -------------------------------------
def rdn_forward(prepped, x_nchw, mask3):
    N, Cin, H, W = x_nchw.shape
    HW = H * W
    x = x_nchw.reshape(N, Cin, HW)

    sfe1 = conv_flat(x, prepped["sfe1"], mask3, H, W, ksize=3)
    sfe2 = conv_flat(sfe1, prepped["sfe2"], mask3, H, W, ksize=3)

    xx = sfe2
    feats = []
    for blk in prepped["rdbs"]:
        xx = rdb_block(xx, blk["layers"], blk["lff"], mask3, H, W)
        feats.append(xx)

    gf = conv_flat(jnp.concatenate(feats, axis=1), prepped["gff1"], mask3, H, W,
                   ksize=1)
    gf = conv_flat(gf, prepped["gff2"], mask3, H, W, ksize=3, residual=sfe1)
    out = conv_flat(gf, prepped["out"], mask3, H, W, ksize=3)
    return out.reshape(N, out.shape[1], H, W)


# ------------------------- pure-JAX reference (NCHW) -------------------------
def _conv2d_ref(x, w, b, pad):
    y = jax.lax.conv_general_dilated(
        x, w, window_strides=(1, 1), padding=((pad, pad), (pad, pad)),
        dimension_numbers=("NCHW", "OIHW", "NCHW"),
        precision=jax.lax.Precision.HIGHEST)
    return y + b[None, :, None, None]


def rdn_reference(p, x):
    sfe1 = _conv2d_ref(x, *p["sfe1"], 1)
    sfe2 = _conv2d_ref(sfe1, *p["sfe2"], 1)
    xx = sfe2
    feats = []
    for blk in p["rdbs"]:
        cur = xx
        for (w, b) in blk["layers"]:
            cur = jnp.concatenate([cur, jax.nn.relu(_conv2d_ref(cur, w, b, 1))],
                                  axis=1)
        xx = xx + _conv2d_ref(cur, *blk["lff"], 0)
        feats.append(xx)
    gf = _conv2d_ref(jnp.concatenate(feats, axis=1), *p["gff1"], 0)
    gf = _conv2d_ref(gf, *p["gff2"], 1) + sfe1
    return _conv2d_ref(gf, *p["out"], 1)


if __name__ == "__main__":
    # Small config. Note: this RDN design requires G0 == G for the block
    # chaining / gff channel counts to be consistent (as in the original code).
    N, num_channels, H, W = 2, 3, 16, 16
    G0 = 8   # num_features
    G = 8    # growth_rate
    D = 2    # num_blocks
    C = 2    # num_layers

    key = jax.random.PRNGKey(0)
    kx, kp = jax.random.split(key)
    x = jax.random.normal(kx, (N, num_channels, H, W), jnp.float32)
    params = init_rdn_params(kp, num_channels, G0, G, D, C)
    prepped = prep_params(params)
    mask3 = make_tap_masks(H, W)

    _roll_is_numpy_convention()            # resolve roll convention before jit

    fwd = jax.jit(rdn_forward)
    out = fwd(prepped, x, mask3)
    jax.block_until_ready(out)

    assert out.shape == (N, G0, H, W), out.shape
    assert out.dtype == jnp.float32
    assert bool(jnp.all(jnp.isfinite(out)))

    # Numerical check against a pure-JAX f32 reference (kernel uses bf16 MXU
    # operands with f32 accumulation, hence the loose normalized tolerance).
    ref = rdn_reference(params, x)
    err = float(jnp.max(jnp.abs(out - ref)) / (jnp.max(jnp.abs(ref)) + 1e-8))
    assert err < 5e-2, f"kernel/reference mismatch: normalized max err {err}"

    print("KERNEL_OK")
</pallas_src>

<mosaic_0001>
module attributes {stable_mosaic.version = 11 : i64} {
  func.func @k(%arg0: memref<8x128xf32, #tpu.memory_space<vmem>>, %arg1: memref<8x128xf32, #tpu.memory_space<vmem>>) attributes {dimension_semantics = [], scalar_prefetch = 0 : i64, scratch_operands = 0 : i64, tpu.core_type = #tpu.core_type<tc>} {
    %c0 = arith.constant 0 : index
    %c0_0 = arith.constant 0 : index
    %0 = vector.load %arg0[%c0, %c0_0] : memref<8x128xf32, #tpu.memory_space<vmem>>, vector<8x128xf32>
    %c1_i32 = arith.constant 1 : i32
    %1 = tpu.dynamic_rotate %0 by %c1_i32 dim 1 : vector<8x128xf32>, i32 -> vector<8x128xf32>
    %c0_1 = arith.constant 0 : index
    %c0_2 = arith.constant 0 : index
    %2 = vector.load %arg1[%c0_1, %c0_2] : memref<8x128xf32, #tpu.memory_space<vmem>>, vector<8x128xf32>
    tpu.vector_store %arg1[%c0_1, %c0_2], %1 {strides = array<i32>} : memref<8x128xf32, #tpu.memory_space<vmem>>, vector<8x128xf32>,
    return
  }
}

</mosaic_0001>

<llo_original>
// kernel: tpu_custom_call.1
$region0: #{tpu_custom_call.1}
  #allocation0 [shape = 'u32[]', space=smem, size = 0x4, offset = 0x4, fixed_abs, tag = 'smem constant byte address 0x4 - core index']
  #allocation1 [shape = 'u32[144,128]{1,0:T(1,128)}', space=vmem, size = 0x12000, scoped, tag = 'internal scratch']
  %s0 = inlined_call_operand.hbm [shape: f32[8,128], index: 0, kind: input, shape index: {}]
  %s1 = inlined_call_operand.hbm [shape: f32[8,128], index: 1, kind: output, shape index: {}]
  %s2 = sld [smem:[#allocation0]]
  $region18: #{tpu_custom_call.1} parent=0
    _
  %s4 = ssub.s32 1, %s2
  %s5 = scalar_select 0, %s4, %s2
  $region1: #{tpu_custom_call.1} parent=0
    #allocation2 [shape = 'u8[4096]{0}', space=vmem, size = 0x1000, scoped, tag = 'input window, operand 0, single buffered']
    #allocation3 [shape = 's32[1]{0}', space=sflag, size = 0x4, scoped, tag = 'scoped memory for tpu_custom_call.1']
    #allocation4 [shape = 's32[1]{0}', space=sflag, size = 0x4, scoped, tag = 'scoped memory for tpu_custom_call.1']
    #allocation5 [shape = 'u8[4096]{0}', space=vmem, size = 0x1000, scoped, tag = 'output window, operand 0, single buffered']
    %6 = vsyncpa [#allocation3], 0
    %7 = vsyncpa [#allocation4], 0
    // Predicated region
    $region2: #{tpu_custom_call.1} parent=1 // pred_check
      _
    $region3: #{tpu_custom_call.1} parent=1 // pred_check_branch
      %9 = sbr.rel (0) target = $region5
    $region4: #{tpu_custom_call.1} parent=1 // pred_region
      %s11 = ssub.s32 128, 128
      %12 = vsyncadd [#allocation3], %s11
      %s14 = sshll.u32 [#allocation2], 4
      %s15 = int_to_ptr.vmem [resolvable:$true] %s14
      %17 = dma.hbm_to_vmem [thread:$0]  %s0, 128, %s15, [#allocation3]
    $region5: #{tpu_custom_call.1} parent=1 // pred_fallthru
      _
    // Predicated region
    $region6: #{tpu_custom_call.1} parent=1 // pred_check
      _
    $region7: #{tpu_custom_call.1} parent=1 // pred_check_branch
      %19 = sbr.rel (0) target = $region9
    $region8: #{tpu_custom_call.1} parent=1 // pred_region
      %20 = dma.done [#allocation3], 128
    $region9: #{tpu_custom_call.1} parent=1 // pred_fallthru
      _
    %v21 = vld [vmem:[#allocation2] sm:$0xff]
    %22 = vrot.lane.b32.xlu0 %v21, 1
    %v23 = vpop.permute.xlu0 %22
    %24 = vst [vmem:[#allocation5] sm:$0xff] %v23
    // Predicated region
    $region10: #{tpu_custom_call.1} parent=1 // pred_check
      _
    $region11: #{tpu_custom_call.1} parent=1 // pred_check_branch
      %26 = sbr.rel (0) target = $region13
    $region12: #{tpu_custom_call.1} parent=1 // pred_region
      %s28 = ssub.s32 128, 128
      %29 = vsyncadd [#allocation4], %s28
      %s31 = sshll.u32 [#allocation5], 4
      %s32 = int_to_ptr.vmem [resolvable:$true] %s31
      %34 = dma.vmem_to_hbm [thread:$0]  %s32, 128, %s1, [#allocation4]
    $region13: #{tpu_custom_call.1} parent=1 // pred_fallthru
      _
    // Predicated region
    $region14: #{tpu_custom_call.1} parent=1 // pred_check
      _
    $region15: #{tpu_custom_call.1} parent=1 // pred_check_branch
      %36 = sbr.rel (0) target = $region17
    $region16: #{tpu_custom_call.1} parent=1 // pred_region
      %37 = dma.done [#allocation4], 128
    $region17: #{tpu_custom_call.1} parent=1 // pred_fallthru
      _
    %38 = vsyncpa [#allocation3], 1
    %39 = vsyncpa [#allocation4], 1

</llo_original>
